<compile_context>
chip_gen: v7x
topology: tpu7x:2x2x1
jax: 0.10.0
libtpu: 0.0.40
codegen_flags: <defaults>
</compile_context>

<pallas_src>
import functools

import jax
import jax.numpy as jnp
from jax.experimental import pallas as pl
from jax.experimental.pallas import tpu as pltpu


def cag_pool_kernel(x_ref, avg_ref, max_ref, sum_acc, max_acc,
                    *, hw_true, block_hw, block_c):
    hw_idx = pl.program_id(1)
    n_hw = pl.num_programs(1)

    c = x_ref.shape[1]
    n_chunks = block_hw // 128                       # static
    n_cblk = pl.cdiv(c, block_c)                     # static
    has_tail = (hw_true % block_hw) != 0             # static

    # ---- init accumulators at the start of each sample's HW loop ----
    @pl.when(hw_idx == 0)
    def _():
        sum_acc[...] = jnp.zeros_like(sum_acc)
        max_acc[...] = jnp.full_like(max_acc, -jnp.inf)

    def reduce_tile(masked):
        # `masked` is a static Python bool.
        if masked:
            lane = jax.lax.broadcasted_iota(jnp.int32, (1, 1, 128), 2)
            tile_start = hw_idx * block_hw
        for cb in range(n_cblk):
            c0 = cb * block_c
            csz = min(block_c, c - c0)

            def body(k, carry):
                s, m = carry
                off = pl.multiple_of(k * 128, 128)
                chunk = x_ref[:, c0:c0 + csz, pl.ds(off, 128)].astype(jnp.float32)
                if masked:
                    valid = (tile_start + off + lane) < hw_true   # (1,1,128)
                    s = s + jnp.where(valid, chunk, 0.0)
                    m = jnp.maximum(m, jnp.where(valid, chunk, -jnp.inf))
                else:
                    s = s + chunk
                    m = jnp.maximum(m, chunk)
                return s, m

            s0 = sum_acc[:, c0:c0 + csz, :]
            m0 = max_acc[:, c0:c0 + csz, :]
            s, m = jax.lax.fori_loop(0, n_chunks, body, (s0, m0),
                                     unroll=min(4, n_chunks))
            sum_acc[:, c0:c0 + csz, :] = s
            max_acc[:, c0:c0 + csz, :] = m

    if has_tail:
        # Only the final HW tile contains padding; earlier tiles take the
        # pure add/max fast path.
        @pl.when(hw_idx == n_hw - 1)
        def _():
            reduce_tile(masked=True)

        @pl.when(hw_idx < n_hw - 1)
        def _():
            reduce_tile(masked=False)
    else:
        reduce_tile(masked=False)

    # ---- per-sample epilogue: single cross-lane reduce + output store ----
    @pl.when(hw_idx == n_hw - 1)
    def _():
        avg_ref[...] = (jnp.sum(sum_acc[...], axis=-1) *
                        (1.0 / hw_true)).reshape(avg_ref.shape)
        max_ref[...] = jnp.max(max_acc[...], axis=-1).reshape(max_ref.shape)


def cag_fc_kernel(avg_ref, max_ref, w1t_ref, b1_ref, w2t_ref, b2_ref, o_ref):
    # Batched (M = N) 1x1-conv FCs on the MXU, per-branch ReLU, then sigmoid.
    fc1 = jnp.dot(avg_ref[...], w1t_ref[...],
                  preferred_element_type=jnp.float32) + b1_ref[...]
    fc2 = jnp.dot(max_ref[...], w2t_ref[...],
                  preferred_element_type=jnp.float32) + b2_ref[...]
    o_ref[...] = jax.nn.sigmoid(jnp.maximum(fc1, 0.0) + jnp.maximum(fc2, 0.0))


def _choose_block_hw(C, HW, itemsize, target_bytes=4 * 1024 * 1024):
    """Pick a 128-multiple HW tile of roughly 4 MiB (amortizes ~0.35us/step)."""
    cap = (target_bytes // (max(C, 1) * itemsize)) // 128 * 128
    cap = max(128, min(cap, 8192))
    hw128 = pl.cdiv(HW, 128) * 128
    if hw128 <= cap:
        return hw128
    # Prefer an exact-divisor tile only if it stays within ~2x of the cap.
    for cand in range(cap, max(cap // 2, 128) - 1, -128):
        if HW % cand == 0:
            return cand
    return cap


def cag_forward(x_nchw, w1, b1, w2, b2, *, block_hw=None, block_c=32):
    """x_nchw: (N, C, H, W) f32/bf16. w1/w2: (C, C). b1/b2: (C,). -> (N,C,1,1) f32."""
    N, C, H, W = x_nchw.shape
    HW = H * W
    itemsize = jnp.dtype(x_nchw.dtype).itemsize

    if block_hw is None:
        block_hw = _choose_block_hw(C, HW, itemsize)
    block_hw = max(128, (block_hw // 128) * 128)

    n_hw = pl.cdiv(HW, block_hw)
    hw_pad = n_hw * block_hw

    # Keep the native dtype (bf16 halves HBM traffic); cast per chunk in-kernel.
    x_flat = x_nchw.reshape(N, C, HW)
    if hw_pad != HW:
        # zero-pad: fine for the sum path; the max path is masked in-kernel.
        x_flat = jnp.pad(x_flat, ((0, 0), (0, 0), (0, hw_pad - HW)))

    # Channel slab: multiple of 8 sublanes (aligned scratch stores), <= C.
    if block_c < C:
        block_c = max(8, (block_c // 8) * 8)
    block_c = min(block_c, C)

    pool_kernel = functools.partial(cag_pool_kernel, hw_true=HW,
                                    block_hw=block_hw, block_c=block_c)

    cost = pl.CostEstimate(
        flops=2 * N * C * HW,
        transcendentals=0,
        bytes_accessed=N * C * hw_pad * itemsize + 2 * N * C * 4,
    )

    avg3d, max3d = pl.pallas_call(
        pool_kernel,
        out_shape=(jax.ShapeDtypeStruct((N, 1, C), jnp.float32),
                   jax.ShapeDtypeStruct((N, 1, C), jnp.float32)),
        grid_spec=pltpu.PrefetchScalarGridSpec(
            num_scalar_prefetch=0,
            grid=(N, n_hw),
            in_specs=[
                pl.BlockSpec((1, C, block_hw), lambda n, h: (n, 0, h)),
            ],
            out_specs=[
                pl.BlockSpec((1, 1, C), lambda n, h: (n, 0, 0)),
                pl.BlockSpec((1, 1, C), lambda n, h: (n, 0, 0)),
            ],
            scratch_shapes=[
                pltpu.VMEM((1, C, 128), jnp.float32),   # running partial sum
                pltpu.VMEM((1, C, 128), jnp.float32),   # running partial max
            ],
        ),
        compiler_params=pltpu.CompilerParams(
            dimension_semantics=("parallel", "arbitrary"),
            vmem_limit_bytes=32 * 1024 * 1024,
        ),
        cost_estimate=cost,
    )(x_flat)

    # Pre-transpose weights once in XLA; epilogue is a tiny single-shot kernel.
    w1t = jnp.asarray(w1, jnp.float32).T            # (C_in, C_out)
    w2t = jnp.asarray(w2, jnp.float32).T
    b1_2d = jnp.asarray(b1, jnp.float32).reshape(1, C)
    b2_2d = jnp.asarray(b2, jnp.float32).reshape(1, C)

    gates = pl.pallas_call(
        cag_fc_kernel,
        out_shape=jax.ShapeDtypeStruct((N, C), jnp.float32),
    )(avg3d.reshape(N, C), max3d.reshape(N, C), w1t, b1_2d, w2t, b2_2d)

    return gates.reshape(N, C, 1, 1)


def _reference(x, w1, b1, w2, b2):
    """Pure-JAX reference mirroring the PyTorch forward."""
    xf = x.astype(jnp.float32)
    avg = jnp.mean(xf, axis=(2, 3))                      # (N, C)
    mx = jnp.max(xf, axis=(2, 3))                        # (N, C)
    fc1 = jnp.maximum(avg @ w1.T + b1, 0.0)
    fc2 = jnp.maximum(mx @ w2.T + b2, 0.0)
    return jax.nn.sigmoid(fc1 + fc2)[:, :, None, None]   # (N, C, 1, 1)


if __name__ == "__main__":
    key = jax.random.PRNGKey(0)
    (k_x, k_w1, k_b1, k_w2, k_b2,
     k_x2, k_x3, k_w13, k_b13, k_w23, k_b23) = jax.random.split(key, 11)

    N, C, H, W = 2, 4, 16, 16
    x = jax.random.normal(k_x, (N, C, H, W), dtype=jnp.float32)

    # Conv2d(C, C, 1) -> weight (C, C), bias (C,)
    w1 = jax.random.normal(k_w1, (C, C), dtype=jnp.float32) * 0.1
    b1 = jax.random.normal(k_b1, (C,), dtype=jnp.float32) * 0.1
    w2 = jax.random.normal(k_w2, (C, C), dtype=jnp.float32) * 0.1
    b2 = jax.random.normal(k_b2, (C,), dtype=jnp.float32) * 0.1

    # Test 1: multi-tile HW reduction (block_hw=128 -> 2 HW tiles per sample).
    out = jax.block_until_ready(cag_forward(x, w1, b1, w2, b2, block_hw=128))
    ref = _reference(x, w1, b1, w2, b2)
    assert out.shape == (N, C, 1, 1), out.shape
    assert jnp.allclose(out, ref, atol=1e-5, rtol=1e-5), (
        f"max abs err {jnp.max(jnp.abs(out - ref))}"
    )

    # Test 2: ragged HW (10x10 = 100, padded to 128) with all-negative inputs to
    # exercise the -inf masking on the max branch.
    x2 = jax.random.normal(k_x2, (N, C, 10, 10), dtype=jnp.float32) * 0.1 - 3.0
    out2 = jax.block_until_ready(cag_forward(x2, w1, b1, w2, b2))
    ref2 = _reference(x2, w1, b1, w2, b2)
    assert jnp.allclose(out2, ref2, atol=1e-5, rtol=1e-5), (
        f"max abs err {jnp.max(jnp.abs(out2 - ref2))}"
    )

    # Test 3: bf16 input, N=1, C=16 with multiple channel slabs (block_c=8),
    # ragged HW (12x12 = 144, padded to 256 -> masked last tile).
    C3 = 16
    x3 = jax.random.normal(k_x3, (1, C3, 12, 12), dtype=jnp.float32)
    x3 = x3.astype(jnp.bfloat16)
    w13 = jax.random.normal(k_w13, (C3, C3), dtype=jnp.float32) * 0.1
    b13 = jax.random.normal(k_b13, (C3,), dtype=jnp.float32) * 0.1
    w23 = jax.random.normal(k_w23, (C3, C3), dtype=jnp.float32) * 0.1
    b23 = jax.random.normal(k_b23, (C3,), dtype=jnp.float32) * 0.1
    out3 = jax.block_until_ready(
        cag_forward(x3, w13, b13, w23, b23, block_c=8))
    ref3 = _reference(x3, w13, b13, w23, b23)
    assert jnp.allclose(out3, ref3, atol=2e-5, rtol=1e-5), (
        f"max abs err {jnp.max(jnp.abs(out3 - ref3))}"
    )

    print("KERNEL_OK")
</pallas_src>

<mosaic_0001>
module attributes {stable_mosaic.version = 11 : i64} {
  func.func @cag_pool_kernel(%arg0: i32, %arg1: i32, %arg2: memref<1x4x128xf32, #tpu.memory_space<vmem>>, %arg3: memref<1x1x4xf32, #tpu.memory_space<vmem>>, %arg4: memref<1x1x4xf32, #tpu.memory_space<vmem>>, %arg5: memref<1x4x128xf32, #tpu.memory_space<vmem>>, %arg6: memref<1x4x128xf32, #tpu.memory_space<vmem>>) attributes {dimension_semantics = [#tpu.dimension_semantics<parallel>, #tpu.dimension_semantics<arbitrary>], iteration_bounds = array<i64: 2, 2>, scalar_prefetch = 0 : i64, scratch_operands = 2 : i64, tpu.core_type = #tpu.core_type<tc>, window_params = [{transform_indices = @transform_0, window_bounds = array<i64: 1, 4, 128>}, {transform_indices = @transform_1, window_bounds = array<i64: 1, 1, 4>}, {transform_indices = @transform_2, window_bounds = array<i64: 1, 1, 4>}]} {
    %c0_i32 = arith.constant 0 : i32
    %0 = arith.cmpi eq, %arg1, %c0_i32 : i32
    %1 = arith.extui %0 : i1 to i32
    %c0_i32_0 = arith.constant 0 : i32
    %2 = arith.cmpi ne, %1, %c0_i32_0 : i32
    scf.if %2 {
      %cst = arith.constant 0.000000e+00 : f32
      %16 = vector.broadcast %cst : f32 to vector<1x4x128xf32>
      %c0_17 = arith.constant 0 : index
      %c0_18 = arith.constant 0 : index
      %c0_19 = arith.constant 0 : index
      %17 = vector.load %arg5[%c0_17, %c0_18, %c0_19] : memref<1x4x128xf32, #tpu.memory_space<vmem>>, vector<1x4x128xf32>
      tpu.vector_store %arg5[%c0_17, %c0_18, %c0_19], %16 {strides = array<i32>} : memref<1x4x128xf32, #tpu.memory_space<vmem>>, vector<1x4x128xf32>,
      %cst_20 = arith.constant 0xFF800000 : f32
      %18 = vector.broadcast %cst_20 : f32 to vector<1x4x128xf32>
      %c0_21 = arith.constant 0 : index
      %c0_22 = arith.constant 0 : index
      %c0_23 = arith.constant 0 : index
      %19 = vector.load %arg6[%c0_21, %c0_22, %c0_23] : memref<1x4x128xf32, #tpu.memory_space<vmem>>, vector<1x4x128xf32>
      tpu.vector_store %arg6[%c0_21, %c0_22, %c0_23], %18 {strides = array<i32>} : memref<1x4x128xf32, #tpu.memory_space<vmem>>, vector<1x4x128xf32>,
    } else {
    }
    %c0 = arith.constant 0 : index
    %c0_1 = arith.constant 0 : index
    %c0_2 = arith.constant 0 : index
    %3 = vector.load %arg5[%c0, %c0_1, %c0_2] : memref<1x4x128xf32, #tpu.memory_space<vmem>>, vector<1x4x128xf32>
    %c0_3 = arith.constant 0 : index
    %c0_4 = arith.constant 0 : index
    %c0_5 = arith.constant 0 : index
    %4 = vector.load %arg6[%c0_3, %c0_4, %c0_5] : memref<1x4x128xf32, #tpu.memory_space<vmem>>, vector<1x4x128xf32>
    %c0_i32_6 = arith.constant 0 : i32
    %c128_i32 = arith.constant 128 : i32
    %5 = arith.muli %c0_i32_6, %c128_i32 : i32
    %6 = tpu.assume_multiple %5, 128 : i32
    %c0_7 = arith.constant 0 : index
    %c0_8 = arith.constant 0 : index
    %7 = arith.index_cast %6 : i32 to index
    %8 = vector.load %arg2[%c0_7, %c0_8, %7] : memref<1x4x128xf32, #tpu.memory_space<vmem>>, vector<1x4x128xf32>
    %9 = arith.addf %3, %8 : vector<1x4x128xf32>
    %10 = arith.maximumf %4, %8 : vector<1x4x128xf32>
    %c1_i32 = arith.constant 1 : i32
    %c0_9 = arith.constant 0 : index
    %c0_10 = arith.constant 0 : index
    %c0_11 = arith.constant 0 : index
    %11 = vector.load %arg5[%c0_9, %c0_10, %c0_11] : memref<1x4x128xf32, #tpu.memory_space<vmem>>, vector<1x4x128xf32>
    tpu.vector_store %arg5[%c0_9, %c0_10, %c0_11], %9 {strides = array<i32>} : memref<1x4x128xf32, #tpu.memory_space<vmem>>, vector<1x4x128xf32>,
    %c0_12 = arith.constant 0 : index
    %c0_13 = arith.constant 0 : index
    %c0_14 = arith.constant 0 : index
    %12 = vector.load %arg6[%c0_12, %c0_13, %c0_14] : memref<1x4x128xf32, #tpu.memory_space<vmem>>, vector<1x4x128xf32>
    tpu.vector_store %arg6[%c0_12, %c0_13, %c0_14], %10 {strides = array<i32>} : memref<1x4x128xf32, #tpu.memory_space<vmem>>, vector<1x4x128xf32>,
    %c1_i32_15 = arith.constant 1 : i32
    %13 = arith.cmpi eq, %arg1, %c1_i32_15 : i32
    %14 = arith.extui %13 : i1 to i32
    %c0_i32_16 = arith.constant 0 : i32
    %15 = arith.cmpi ne, %14, %c0_i32_16 : i32
    scf.if %15 {
      %c0_17 = arith.constant 0 : index
      %c0_18 = arith.constant 0 : index
      %c0_19 = arith.constant 0 : index
      %16 = vector.load %arg5[%c0_17, %c0_18, %c0_19] : memref<1x4x128xf32, #tpu.memory_space<vmem>>, vector<1x4x128xf32>
      %cst = arith.constant dense<0.000000e+00> : vector<1x4xf32>
      %17 = vector.multi_reduction <add>, %16, %cst [2] : vector<1x4x128xf32> to vector<1x4xf32>
      %cst_20 = arith.constant 3.906250e-03 : f32
      %18 = vector.broadcast %cst_20 : f32 to vector<1x4xf32>
      %19 = arith.mulf %17, %18 : vector<1x4xf32>
      %20 = vector.shape_cast %19 : vector<1x4xf32> to vector<1x1x4xf32>
      %c0_21 = arith.constant 0 : index
      %c0_22 = arith.constant 0 : index
      %c0_23 = arith.constant 0 : index
      %21 = vector.load %arg3[%c0_21, %c0_22, %c0_23] : memref<1x1x4xf32, #tpu.memory_space<vmem>>, vector<1x1x4xf32>
      tpu.vector_store %arg3[%c0_21, %c0_22, %c0_23], %20 {strides = array<i32>} : memref<1x1x4xf32, #tpu.memory_space<vmem>>, vector<1x1x4xf32>,
      %c0_24 = arith.constant 0 : index
      %c0_25 = arith.constant 0 : index
      %c0_26 = arith.constant 0 : index
      %22 = vector.load %arg6[%c0_24, %c0_25, %c0_26] : memref<1x4x128xf32, #tpu.memory_space<vmem>>, vector<1x4x128xf32>
      %cst_27 = arith.constant dense<0xFF800000> : vector<1x4xf32>
      %23 = vector.multi_reduction <maximumf>, %22, %cst_27 [2] : vector<1x4x128xf32> to vector<1x4xf32>
      %24 = vector.shape_cast %23 : vector<1x4xf32> to vector<1x1x4xf32>
      %c0_28 = arith.constant 0 : index
      %c0_29 = arith.constant 0 : index
      %c0_30 = arith.constant 0 : index
      %25 = vector.load %arg4[%c0_28, %c0_29, %c0_30] : memref<1x1x4xf32, #tpu.memory_space<vmem>>, vector<1x1x4xf32>
      tpu.vector_store %arg4[%c0_28, %c0_29, %c0_30], %24 {strides = array<i32>} : memref<1x1x4xf32, #tpu.memory_space<vmem>>, vector<1x1x4xf32>,
    } else {
    }
    return
  }
  func.func @transform_0(%arg0: i32, %arg1: i32) -> (i32, i32, i32) {
    %c0_i32 = arith.constant 0 : i32
    %c0_i32_0 = arith.constant 0 : i32
    return %arg0, %c0_i32, %arg1 : i32, i32, i32
  }
  func.func @transform_1(%arg0: i32, %arg1: i32) -> (i32, i32, i32) {
    %c0_i32 = arith.constant 0 : i32
    %c0_i32_0 = arith.constant 0 : i32
    %c0_i32_1 = arith.constant 0 : i32
    return %arg0, %c0_i32, %c0_i32_0 : i32, i32, i32
  }
  func.func @transform_2(%arg0: i32, %arg1: i32) -> (i32, i32, i32) {
    %c0_i32 = arith.constant 0 : i32
    %c0_i32_0 = arith.constant 0 : i32
    %c0_i32_1 = arith.constant 0 : i32
    return %arg0, %c0_i32, %c0_i32_0 : i32, i32, i32
  }
}

</mosaic_0001>

<llo_original>
// kernel: tpu_custom_call.1
$region0: #{tpu_custom_call.1}
  #allocation0 [shape = 'u32[]', space=smem, size = 0x4, offset = 0x4, fixed_abs, tag = 'smem constant byte address 0x4 - core index']
  #allocation1 [shape = 'u32[144,128]{1,0:T(1,128)}', space=vmem, size = 0x12000, scoped, tag = 'internal scratch']
  #allocation2 [shape = 'f32[1,4,128]{2,1,0:T(4,128)}', space=vmem, size = 0x800, scoped, tag = 'scratch operand']
  #allocation3 [shape = 'f32[1,4,128]{2,1,0:T(4,128)}', space=vmem, size = 0x800, scoped, tag = 'scratch operand']
  %s0 = inlined_call_operand.hbm [shape: f32[2,4,256], index: 0, kind: input, shape index: {}]
  %s1 = inlined_call_operand.hbm [shape: f32[2,1,4], index: 1, kind: output, shape index: {0}]
  %s2 = inlined_call_operand.hbm [shape: f32[2,1,4], index: 2, kind: output, shape index: {1}]
  %3 = xla_tuple %s1, %s2
  %s4 = sld [smem:[#allocation0]]
  $region57: #{tpu_custom_call.1} parent=0
    _
  %s6 = ssub.s32 1, %s4
  %s7 = scalar_select 0, %s6, %s4
  $region1: #{tpu_custom_call.1} parent=0
    #allocation4 [shape = 'u8[4096]{0}', space=vmem, size = 0x1000, scoped, tag = 'input window, operand 0']
    #allocation5 [shape = 's32[2]{0}', space=sflag, size = 0x8, scoped, tag = 'scoped memory for tpu_custom_call.1']
    #allocation6 [shape = 's32[2]{0}', space=sflag, size = 0x8, scoped, tag = 'scoped memory for tpu_custom_call.1']
    #allocation7 [shape = 'u8[1024]{0}', space=vmem, size = 0x400, scoped, tag = 'output window, operand 0']
    #allocation8 [shape = 'u8[1024]{0}', space=vmem, size = 0x400, scoped, tag = 'output window, operand 1']
    #allocation9 [shape = 's32[2]{0}', space=sflag, size = 0x8, scoped, tag = 'scoped memory for tpu_custom_call.1']
    %8 = vsyncpa [#allocation5], 0
    %s9 = scalar_lea.sflag [#allocation5], 1
    %10 = vsyncpa %s9, 0
    %11 = vsyncpa [#allocation6], 0
    %s12 = scalar_lea.sflag [#allocation6], 1
    %13 = vsyncpa %s12, 0
    %14 = vsyncpa [#allocation9], 0
    %s15 = scalar_lea.sflag [#allocation9], 1
    %16 = vsyncpa %s15, 0
    loop: start=0, step=1, limit=6
    $region2: #{tpu_custom_call.1} parent=1 // loop_pre_header
      _
    $region3: #{tpu_custom_call.1} parent=1 // loop_header
      %s18 = sphi 0, %s22
      %p19 = scmp.ge.s32.totalorder %s18, 6
      %s25 = sphi 0, %s37
      %s26 = sphi 0, %s33
      %s27 = sphi 0, %s25
      %s28 = sphi 0, %s26
      %s29 = sphi 0, %s27
      %s30 = sphi 0, %s28
      %s42 = sphi 0, %s44
      %s45 = sphi 0, %s42
      %s46 = sphi 0, %s45
      %s62 = sphi 0, %s46
      %s68 = sphi 0, %s70
      %s71 = sphi 0, %s68
      %s72 = sphi 0, %s71
      %s88 = sphi 0, %s72
      %s94 = sphi 0, %s96
      %s97 = sphi 0, %s94
      %s98 = sphi 0, %s97
      %s114 = sphi 0, %s98
    $region4: #{tpu_custom_call.1} parent=1 // loop_header_branch
      %21 = sbr.rel (%p19) target = $region8
    $region5: #{tpu_custom_call.1} parent=1 // loop_body
      %s23 = ssub.s32 %s18, 1
      %s24 = ssub.s32 %s18, 2
      %s31 = sadd.s32 1, %s26
      %p32 = scmp.ge.s32.totalorder %s31, 2
      %s33 = scalar_select %p32, 0, %s31
      %s34 = sadd.s32 1, %s25
      %s35 = scalar_select %p32, %s34, %s25
      %p36 = scmp.ge.s32.totalorder %s35, 2
      %s37 = scalar_select %p36, 0, %s35
      %s38 = ssub.s32 %s25, %s37
      %s39 = ssub.s32 %s26, %s33
      %s40 = sor.u32 %s38, %s39
      %p41 = scmp.eq.s32.totalorder %s40, 0
      %s43 = sadd.s32 %s42, 1
      %s44 = scalar_select %p41, %s42, %s43
      %p47 = pneg %p41
      %p48 = scmp.eq.s32.totalorder %s18, 3
      %p49 = por %p47, %p48
      %p50 = scmp.ne.s32.totalorder %s42, %s45
      %p51 = scmp.eq.s32.totalorder %s18, 0
      %p52 = por %p50, %p51
      %p53 = scmp.ne.s32.totalorder %s42, %s45
      %p54 = scmp.eq.s32.totalorder %s23, 3
      %p55 = por %p53, %p54
      %p56 = scmp.ne.s32.totalorder %s45, %s46
      %p57 = scmp.eq.s32.totalorder %s23, 0
      %p58 = por %p56, %p57
      %p59 = scmp.ne.s32.totalorder %s45, %s46
      %p60 = scmp.eq.s32.totalorder %s24, 3
      %p61 = por %p59, %p60
      %p63 = scmp.ne.s32.totalorder %s46, %s62
      %p64 = scmp.eq.s32.totalorder %s24, 0
      %p65 = por %p63, %p64
      %s66 = ssub.s32 %s25, %s37
      %p67 = scmp.eq.s32.totalorder %s66, 0
      %s69 = sadd.s32 %s68, 1
      %s70 = scalar_select %p67, %s68, %s69
      %p73 = pneg %p67
      %p74 = scmp.eq.s32.totalorder %s18, 3
      %p75 = por %p73, %p74
      %p76 = scmp.ne.s32.totalorder %s68, %s71
      %p77 = scmp.eq.s32.totalorder %s18, 0
      %p78 = por %p76, %p77
      %p79 = scmp.ne.s32.totalorder %s68, %s71
      %p80 = scmp.eq.s32.totalorder %s23, 3
      %p81 = por %p79, %p80
      %p82 = scmp.ne.s32.totalorder %s71, %s72
      %p83 = scmp.eq.s32.totalorder %s23, 0
      %p84 = por %p82, %p83
      %p85 = scmp.ne.s32.totalorder %s71, %s72
      %p86 = scmp.eq.s32.totalorder %s24, 3
      %p87 = por %p85, %p86
      %p89 = scmp.ne.s32.totalorder %s72, %s88
      %p90 = scmp.eq.s32.totalorder %s24, 0
      %p91 = por %p89, %p90
      %s92 = ssub.s32 %s25, %s37
      %p93 = scmp.eq.s32.totalorder %s92, 0
      %s95 = sadd.s32 %s94, 1
      %s96 = scalar_select %p93, %s94, %s95
      %p99 = pneg %p93
      %p100 = scmp.eq.s32.totalorder %s18, 3
      %p101 = por %p99, %p100
      %p102 = scmp.ne.s32.totalorder %s94, %s97
      %p103 = scmp.eq.s32.totalorder %s18, 0
      %p104 = por %p102, %p103
      %p105 = scmp.ne.s32.totalorder %s94, %s97
      %p106 = scmp.eq.s32.totalorder %s23, 3
      %p107 = por %p105, %p106
      %p108 = scmp.ne.s32.totalorder %s97, %s98
      %p109 = scmp.eq.s32.totalorder %s23, 0
      %p110 = por %p108, %p109
      %p111 = scmp.ne.s32.totalorder %s97, %s98
      %p112 = scmp.eq.s32.totalorder %s24, 3
      %p113 = por %p111, %p112
      %p115 = scmp.ne.s32.totalorder %s98, %s114
      %p116 = scmp.eq.s32.totalorder %s24, 0
      %p117 = por %p115, %p116
      %p118 = scmp.le.s32.totalorder 1, %s18
      %p119 = scmp.lt.s32.totalorder %s18, 5
      %p120 = pnand %p118, %p119
      %p121 = pneg %p120
      // Predicated region
      $region9: #{tpu_custom_call.1} parent=5 // pred_check
        _
      $region10: #{tpu_custom_call.1} parent=5 // pred_check_branch
        %123 = sbr.rel (%p120) target = $region12
      $region11: #{tpu_custom_call.1} parent=5 // pred_region
        %s124 = ssub.s32 %s18, 1
      $region12: #{tpu_custom_call.1} parent=5 // pred_fallthru
        _
      %p125 = scmp.lt.s32.totalorder %s18, 4
      // Predicated region
      $region13: #{tpu_custom_call.1} parent=5 // pred_check
        %p126 = pneg %p125
      $region14: #{tpu_custom_call.1} parent=5 // pred_check_branch
        %128 = sbr.rel (%p126) target = $region16
      $region15: #{tpu_custom_call.1} parent=5 // pred_region
        // Predicated region
        $region17: #{tpu_custom_call.1} parent=15 // pred_check
          %p129 = pneg %p52
        $region18: #{tpu_custom_call.1} parent=15 // pred_check_branch
          %131 = sbr.rel (%p129) target = $region20
        $region19: #{tpu_custom_call.1} parent=15 // pred_region
          %s132 = sand.u32 %s42, 1
          %s133 = scalar_lea.sflag [#allocation5], %s132
          %s134 = sand.u32 %s42, 1
          %s135 = smul.addr %s134, 4
          %s136 = scalar_lea.vmem [#allocation4], %s135
          %s138 = ssub.s32 64, 64
          %139 = vsyncadd %s133, %s138
          %s140 = smul.addr %s25, 2
          %s141 = sadd.s32 %s26, %s140
          %s142 = smul.addr %s141, 64
          %s143 = scalar_lea.hbm %s0, %s142
          %s145 = sshll.u32 %s136, 4
          %s146 = int_to_ptr.vmem [resolvable:$true] %s145
          %148 = dma.hbm_to_vmem [thread:$0]  %s143, 64, %s146, %s133
        $region20: #{tpu_custom_call.1} parent=15 // pred_fallthru
          _
      $region16: #{tpu_custom_call.1} parent=5 // pred_fallthru
        _
      %p149 = scmp.le.s32.totalorder 1, %s18
      %p150 = scmp.lt.s32.totalorder %s18, 5
      %p151 = pnand %p149, %p150
      %p152 = pneg %p151
      // Predicated region
      $region21: #{tpu_custom_call.1} parent=5 // pred_check
        _
      $region22: #{tpu_custom_call.1} parent=5 // pred_check_branch
        %154 = sbr.rel (%p151) target = $region24
      $region23: #{tpu_custom_call.1} parent=5 // pred_region
        %s155 = ssub.s32 %s18, 1
        %s156 = sand.u32 %s45, 1
        %s157 = scalar_lea.sflag [#allocation5], %s156
        %s158 = sand.u32 %s45, 1
        %s159 = smul.addr %s158, 4
        %s160 = scalar_lea.vmem [#allocation4], %s159
        // Predicated region
        $region25: #{tpu_custom_call.1} parent=23 // pred_check
          %p161 = pneg %p58
        $region26: #{tpu_custom_call.1} parent=23 // pred_check_branch
          %163 = sbr.rel (%p161) target = $region28
        $region27: #{tpu_custom_call.1} parent=23 // pred_region
          %164 = dma.done %s157, 64
        $region28: #{tpu_custom_call.1} parent=23 // pred_fallthru
          _
        %s165 = sand.u32 %s45, 1
        %s166 = scalar_lea.sflag [#allocation5], %s165
        %s167 = sand.u32 %s45, 1
        %s168 = smul.addr %s167, 4
        %s169 = scalar_lea.vmem [#allocation4], %s168
        %p170 = pneg %p58
        %p171 = pneg %p55
        %p172 = pneg %p84
        %p173 = pneg %p81
        %s174 = sand.u32 %s71, 1
        %s175 = scalar_lea.sflag [#allocation6], %s174
        %s176 = sand.u32 %s71, 1
        %s177 = scalar_lea.vmem [#allocation7], %s176
        %p178 = pneg %p110
        %p179 = pneg %p107
        %s180 = sand.u32 %s97, 1
        %s181 = scalar_lea.sflag [#allocation9], %s180
        %s182 = sand.u32 %s97, 1
        %s183 = scalar_lea.vmem [#allocation8], %s182
        %p184 = scmp.eq.s32.totalorder %s28, 0
        // Predicated region
        $region29: #{tpu_custom_call.1} parent=23 // pred_check
          %p185 = pneg %p184
        $region30: #{tpu_custom_call.1} parent=23 // pred_check_branch
          %187 = sbr.rel (%p185) target = $region32
        $region31: #{tpu_custom_call.1} parent=23 // pred_region
          %188 = vst [vmem:[#allocation2] sm:$0xf] 0.0
          %189 = vst [vmem:[#allocation3] sm:$0xf] -inf
        $region32: #{tpu_custom_call.1} parent=23 // pred_fallthru
          _
        %v190 = vld [vmem:[#allocation2] sm:$0xf]
        %v191 = vld [vmem:[#allocation3] sm:$0xf]
        %v192 = vld [vmem:[%s160] sm:$0xf]
        %v193 = vadd.f32 %v190, %v192
        %v194 = vmax.f32 %v191, %v192
        %195 = vst [vmem:[#allocation2] sm:$0xf] %v193
        %196 = vst [vmem:[#allocation3] sm:$0xf] %v194
        %p197 = scmp.eq.s32.totalorder %s28, 1
        // Predicated region
        $region33: #{tpu_custom_call.1} parent=23 // pred_check
          %p198 = pneg %p197
        $region34: #{tpu_custom_call.1} parent=23 // pred_check_branch
          %200 = sbr.rel (%p198) target = $region36
        $region35: #{tpu_custom_call.1} parent=23 // pred_region
          %v201 = vld [vmem:[#allocation2] sm:$0xf]
          %vm202 = vcmask 1043456
          %v203 = vsel %vm202, %v201, 0.0
          %204 = vadd.xlane.f32.xlu0 %v203
          %v205 = vpop.xlane.xlu0 %204
          %v206 = vmul.f32 %v205, 0.00390625
          %v208 = vlaneseq
          %v209 = vand.u32 %v208, 127
          %v210 = vlaneseq
          %v211 = vshrl.u32 %v210, 7
          %v212 = vsub.s32 %v209, %v211
          %v213 = vrot.slane %v206, %v212
          %vm215 = vcmask 24576
          %216 = vst.msk [vmem:[%s177] sm:$0x1] %vm215, %v213
          %v217 = vld [vmem:[#allocation3] sm:$0xf]
          %v218 = vsel %vm202, %v217, -inf
          %219 = vmax.xlane.f32.xlu0 %v218
          %v220 = vpop.xlane.xlu0 %219
          %v222 = vlaneseq
          %v223 = vshrl.u32 %v222, 7
          %v224 = vsub.s32 %v209, %v223
          %v225 = vrot.slane %v220, %v224
          %227 = vst.msk [vmem:[%s183] sm:$0x1] %vm215, %v225
        $region36: #{tpu_custom_call.1} parent=23 // pred_fallthru
          _
        %s228 = sand.u32 %s71, 1
        %s229 = scalar_lea.sflag [#allocation6], %s228
        %s230 = sand.u32 %s71, 1
        %s231 = scalar_lea.vmem [#allocation7], %s230
        %s232 = sand.u32 %s97, 1
        %s233 = scalar_lea.sflag [#allocation9], %s232
        %s234 = sand.u32 %s97, 1
        %s235 = scalar_lea.vmem [#allocation8], %s234
        // Predicated region
        $region37: #{tpu_custom_call.1} parent=23 // pred_check
          %p236 = pneg %p81
        $region38: #{tpu_custom_call.1} parent=23 // pred_check_branch
          %238 = sbr.rel (%p236) target = $region40
        $region39: #{tpu_custom_call.1} parent=23 // pred_region
          %s240 = ssub.s32 16, 16
          %241 = vsyncadd %s229, %s240
          %s242 = smul.addr %s27, 16
          %s243 = scalar_lea.hbm %s1, %s242
          %s245 = sshll.u32 %s231, 4
          %s246 = int_to_ptr.vmem [resolvable:$true] %s245
          %248 = dma.vmem_to_hbm [thread:$0]  %s246, 16, %s243, %s229
        $region40: #{tpu_custom_call.1} parent=23 // pred_fallthru
          _
        // Predicated region
        $region41: #{tpu_custom_call.1} parent=23 // pred_check
          %p249 = pneg %p107
        $region42: #{tpu_custom_call.1} parent=23 // pred_check_branch
          %251 = sbr.rel (%p249) target = $region44
        $region43: #{tpu_custom_call.1} parent=23 // pred_region
          %s253 = ssub.s32 16, 16
          %254 = vsyncadd %s233, %s253
          %s255 = smul.addr %s27, 16
          %s256 = scalar_lea.hbm %s2, %s255
          %s258 = sshll.u32 %s235, 4
          %s259 = int_to_ptr.vmem [resolvable:$true] %s258
          %261 = dma.vmem_to_hbm [thread:$0]  %s259, 16, %s256, %s233
        $region44: #{tpu_custom_call.1} parent=23 // pred_fallthru
          _
      $region24: #{tpu_custom_call.1} parent=5 // pred_fallthru
        _
      %p262 = scmp.le.s32.totalorder 2, %s18
      // Predicated region
      $region45: #{tpu_custom_call.1} parent=5 // pred_check
        %p263 = pneg %p262
      $region46: #{tpu_custom_call.1} parent=5 // pred_check_branch
        %265 = sbr.rel (%p263) target = $region48
      $region47: #{tpu_custom_call.1} parent=5 // pred_region
        %s266 = ssub.s32 %s18, 2
        // Predicated region
        $region49: #{tpu_custom_call.1} parent=47 // pred_check
          %p267 = pneg %p87
        $region50: #{tpu_custom_call.1} parent=47 // pred_check_branch
          %269 = sbr.rel (%p267) target = $region52
        $region51: #{tpu_custom_call.1} parent=47 // pred_region
          %s270 = sand.u32 %s72, 1
          %s271 = scalar_lea.sflag [#allocation6], %s270
          %s272 = sand.u32 %s72, 1
          %s273 = scalar_lea.vmem [#allocation7], %s272
          %274 = dma.done %s271, 16
        $region52: #{tpu_custom_call.1} parent=47 // pred_fallthru
          _
        // Predicated region
        $region53: #{tpu_custom_call.1} parent=47 // pred_check
          %p275 = pneg %p113
        $region54: #{tpu_custom_call.1} parent=47 // pred_check_branch
          %277 = sbr.rel (%p275) target = $region56
        $region55: #{tpu_custom_call.1} parent=47 // pred_region
          %s278 = sand.u32 %s98, 1
          %s279 = scalar_lea.sflag [#allocation9], %s278
          %s280 = sand.u32 %s98, 1
          %s281 = scalar_lea.vmem [#allocation8], %s280
          %282 = dma.done %s279, 16
        $region56: #{tpu_custom_call.1} parent=47 // pred_fallthru
          _
      $region48: #{tpu_custom_call.1} parent=5 // pred_fallthru
        _
    $region6: #{tpu_custom_call.1} parent=1 // loop_footer
      %s22 = sadd.s32 1, %s18
    $region7: #{tpu_custom_call.1} parent=1 // loop_footer_branch
      %17 = sbr.rel target = $region3
    $region8: #{tpu_custom_call.1} parent=1 // loop_exit
      _
    %283 = vsyncpa [#allocation5], 1
    %s284 = scalar_lea.sflag [#allocation5], 1
    %285 = vsyncpa %s284, 1
    %286 = vsyncpa [#allocation6], 1
    %s287 = scalar_lea.sflag [#allocation6], 1
    %288 = vsyncpa %s287, 1
    %289 = vsyncpa [#allocation9], 1
    %s290 = scalar_lea.sflag [#allocation9], 1
    %291 = vsyncpa %s290, 1

</llo_original>
